<compile_context>
chip_gen: v5e
topology: v5e:2x2
jax: 0.10.0
libtpu: 0.0.40
codegen_flags: <defaults>
</compile_context>

<pallas_src>
import jax
import jax.numpy as jnp
from jax.experimental import pallas as pl
from jax.experimental.pallas import tpu as pltpu


# --------------------------------------------------------------------------
# Param slab layout (f32, shape (8, 128)):
#   [:,  0: 4] = W1 (8, 4)     [:,  4: 5] = b1 (8, 1)
#   [:,  5:13] = W2 (8, 8)     [:, 13:14] = b2 (8, 1)
#   [0:3,14:22] = W3 (3, 8)    [0:3,22:23] = b3 (3, 1)
# --------------------------------------------------------------------------


def _affine_relu(w, b, x):
    """relu(w @ x + b) as an unrolled VPU broadcast-MAC.

    w: (out, kin), b: (out, 1), x: (kin, T)  ->  (out, T).
    """
    kin = w.shape[1]
    acc = w[:, 0:1] * x[0:1, :]
    for k in range(1, kin):
        acc = acc + w[:, k:k + 1] * x[k:k + 1, :]
    return jnp.maximum(acc + b, 0.0)


def mlp_kernel(x_ref, p_ref, o_ref):
    x = x_ref[...]                                # (4, T)
    p = p_ref[...]                                # (8, 128) resident param slab

    w1, b1 = p[:, 0:4], p[:, 4:5]                 # (8, 4), (8, 1)
    w2, b2 = p[:, 5:13], p[:, 13:14]              # (8, 8), (8, 1)
    w3, b3 = p[0:3, 14:22], p[0:3, 22:23]         # (3, 8), (3, 1)

    h = _affine_relu(w1, b1, x)                   # (8, T)
    h = _affine_relu(w2, b2, h)                   # (8, T)
    h = _affine_relu(w3, b3, h)                   # (3, T)  ReLU on logits (per module)

    # Softmax over the 3 class rows: sublane-slice max/sum (VPU only),
    # exact reciprocal (hidden under the memory-bound pipeline).
    m = jnp.maximum(jnp.maximum(h[0:1, :], h[1:2, :]), h[2:3, :])   # (1, T)
    e = jnp.exp(h - m)                                              # (3, T)
    l = e[0:1, :] + e[1:2, :] + e[2:3, :]                           # (1, T)
    o_ref[...] = e * pl.reciprocal(l, approx=False)


def _choose_tile(batch, tile_b):
    """Lane-aligned tile, capped so the grid keeps >= ~4 steps when B allows."""
    tile_b = max(128, (tile_b // 128) * 128)
    tile_b = min(tile_b, pl.cdiv(batch, 128) * 128)          # never exceed padded B
    tile_b = min(tile_b, max(128, pl.cdiv(batch, 4 * 128) * 128))  # keep v7x TCs busy
    return tile_b


def neural_clf_forward_cols(x_cols, param_slab, tile_b=4096):
    """Lane-major contract: x_cols (4, B) f32 -> (3, B) softmax probabilities.

    No host-side padding or transposes; the ragged tail block is masked on
    store by Pallas (its garbage lanes never feed a cross-column reduction).
    """
    assert x_cols.shape[0] == 4
    B = x_cols.shape[1]
    tile_b = _choose_tile(B, tile_b)
    grid = (pl.cdiv(B, tile_b),)

    return pl.pallas_call(
        mlp_kernel,
        out_shape=jax.ShapeDtypeStruct((3, B), jnp.float32),
        grid=grid,
        in_specs=[
            pl.BlockSpec((4, tile_b), lambda i: (0, i)),   # x tile (streamed, double-buffered)
            pl.BlockSpec((8, 128), lambda i: (0, 0)),      # packed params (resident)
        ],
        out_specs=pl.BlockSpec((3, tile_b), lambda i: (0, i)),
        compiler_params=pltpu.CompilerParams(
            dimension_semantics=("parallel",)),            # shards grid across v7x TCs
        cost_estimate=pl.CostEstimate(
            flops=270 * B,                 # ~(72 + 136 + 51 + softmax) per sample
            transcendentals=4 * B,         # 3 exp + 1 reciprocal per sample
            bytes_accessed=64 * B + 4096,  # (4,B)+(3,B) f32 padded to 8 sublanes + slab
        ),
    )(x_cols, param_slab)


def neural_clf_forward(x, param_slab, tile_b=4096):
    """PyTorch-boundary shim: x (B, 4) -> (B, 3).

    The transposes here exist only to match the nn.Module contract; in a
    larger graph call neural_clf_forward_cols directly (or fuse the
    transposes into the adjacent producer/consumer).
    """
    return neural_clf_forward_cols(x.T, param_slab, tile_b=tile_b).T


def init_params(key):
    """nn.Linear-style U(-1/sqrt(fan_in), 1/sqrt(fan_in)) init, torch layout."""
    ks = jax.random.split(key, 6)

    def linear(kw, kb, fan_in, fan_out):
        bound = 1.0 / jnp.sqrt(fan_in)
        w = jax.random.uniform(kw, (fan_out, fan_in), jnp.float32, -bound, bound)
        b = jax.random.uniform(kb, (fan_out, 1), jnp.float32, -bound, bound)
        return w, b

    w1, b1 = linear(ks[0], ks[1], 4, 8)
    w2, b2 = linear(ks[2], ks[3], 8, 8)
    w3, b3 = linear(ks[4], ks[5], 8, 3)
    return (w1, b1, w2, b2, w3, b3)


def pack_params(params):
    """Pack all weights/biases into one (8, 128) f32 slab (single resident DMA)."""
    w1, b1, w2, b2, w3, b3 = params
    slab = jnp.zeros((8, 128), jnp.float32)
    slab = slab.at[:, 0:4].set(w1)
    slab = slab.at[:, 4:5].set(b1)
    slab = slab.at[:, 5:13].set(w2)
    slab = slab.at[:, 13:14].set(b2)
    slab = slab.at[0:3, 14:22].set(w3)
    slab = slab.at[0:3, 22:23].set(b3)
    return slab


def reference_forward(x, params):
    w1, b1, w2, b2, w3, b3 = params
    h = jnp.maximum(x @ w1.T + b1.T, 0.0)
    h = jnp.maximum(h @ w2.T + b2.T, 0.0)
    h = jnp.maximum(h @ w3.T + b3.T, 0.0)
    return jax.nn.softmax(h, axis=1)


if __name__ == "__main__":
    key = jax.random.PRNGKey(0)
    k_x, k_p, k_x2 = jax.random.split(key, 3)

    params = init_params(k_p)
    slab = pack_params(params)

    # Small batch: single (masked) tail block, grid=(1,).
    B = 8
    x = jax.random.normal(k_x, (B, 4), dtype=jnp.float32)
    out = jax.block_until_ready(neural_clf_forward(x, slab))
    ref = reference_forward(x, params)
    assert out.shape == (B, 3)
    assert jnp.allclose(out, ref, atol=2e-3, rtol=2e-3)
    assert jnp.allclose(jnp.sum(out, axis=1), jnp.ones((B,)), atol=2e-3)

    # Non-multiple batch via the lane-major contract: multi-step ragged grid,
    # no host-side padding and no transposes around the kernel.
    B2 = 300
    x2 = jax.random.normal(k_x2, (B2, 4), dtype=jnp.float32)
    out2_cols = jax.block_until_ready(neural_clf_forward_cols(x2.T, slab))
    ref2 = reference_forward(x2, params)
    assert out2_cols.shape == (3, B2)
    assert jnp.allclose(out2_cols.T, ref2, atol=2e-3, rtol=2e-3)
    assert jnp.allclose(jnp.sum(out2_cols, axis=0), jnp.ones((B2,)), atol=2e-3)

    print("KERNEL_OK")
</pallas_src>

<mosaic_0001>
module attributes {stable_mosaic.version = 11 : i64} {
  func.func @mlp_kernel(%arg0: i32, %arg1: memref<4x128xf32, #tpu.memory_space<vmem>>, %arg2: memref<8x128xf32, #tpu.memory_space<vmem>>, %arg3: memref<3x128xf32, #tpu.memory_space<vmem>>) attributes {dimension_semantics = [#tpu.dimension_semantics<parallel>], iteration_bounds = array<i64: 1>, scalar_prefetch = 0 : i64, scratch_operands = 0 : i64, tpu.core_type = #tpu.core_type<tc>, window_params = [{transform_indices = @transform_0, window_bounds = array<i64: 4, 128>}, {pipeline_mode = #tpu.pipeline_mode<synchronous>, transform_indices = @transform_1, window_bounds = array<i64: 8, 128>}, {transform_indices = @transform_2, window_bounds = array<i64: 3, 128>}]} {
    %c0 = arith.constant 0 : index
    %c0_0 = arith.constant 0 : index
    %0 = vector.load %arg1[%c0, %c0_0] : memref<4x128xf32, #tpu.memory_space<vmem>>, vector<4x128xf32>
    %c0_1 = arith.constant 0 : index
    %c0_2 = arith.constant 0 : index
    %1 = vector.load %arg2[%c0_1, %c0_2] : memref<8x128xf32, #tpu.memory_space<vmem>>, vector<8x128xf32>
    %2 = vector.extract_strided_slice %1 {offsets = [0, 0], sizes = [8, 4], strides = [1, 1]} : vector<8x128xf32> to vector<8x4xf32>
    %3 = vector.extract_strided_slice %1 {offsets = [0, 4], sizes = [8, 1], strides = [1, 1]} : vector<8x128xf32> to vector<8x1xf32>
    %4 = vector.extract_strided_slice %1 {offsets = [0, 5], sizes = [8, 8], strides = [1, 1]} : vector<8x128xf32> to vector<8x8xf32>
    %5 = vector.extract_strided_slice %1 {offsets = [0, 13], sizes = [8, 1], strides = [1, 1]} : vector<8x128xf32> to vector<8x1xf32>
    %6 = vector.extract_strided_slice %1 {offsets = [0, 14], sizes = [3, 8], strides = [1, 1]} : vector<8x128xf32> to vector<3x8xf32>
    %7 = vector.extract_strided_slice %1 {offsets = [0, 22], sizes = [3, 1], strides = [1, 1]} : vector<8x128xf32> to vector<3x1xf32>
    %8 = vector.extract_strided_slice %2 {offsets = [0, 0], sizes = [8, 1], strides = [1, 1]} : vector<8x4xf32> to vector<8x1xf32>
    %9 = vector.extract_strided_slice %0 {offsets = [0, 0], sizes = [1, 128], strides = [1, 1]} : vector<4x128xf32> to vector<1x128xf32>
    %10 = vector.broadcast %8 : vector<8x1xf32> to vector<8x128xf32>
    %11 = vector.broadcast %9 : vector<1x128xf32> to vector<8x128xf32>
    %12 = arith.mulf %10, %11 : vector<8x128xf32>
    %13 = vector.extract_strided_slice %2 {offsets = [0, 1], sizes = [8, 1], strides = [1, 1]} : vector<8x4xf32> to vector<8x1xf32>
    %14 = vector.extract_strided_slice %0 {offsets = [1, 0], sizes = [1, 128], strides = [1, 1]} : vector<4x128xf32> to vector<1x128xf32>
    %15 = vector.broadcast %13 : vector<8x1xf32> to vector<8x128xf32>
    %16 = vector.broadcast %14 : vector<1x128xf32> to vector<8x128xf32>
    %17 = arith.mulf %15, %16 : vector<8x128xf32>
    %18 = arith.addf %12, %17 : vector<8x128xf32>
    %19 = vector.extract_strided_slice %2 {offsets = [0, 2], sizes = [8, 1], strides = [1, 1]} : vector<8x4xf32> to vector<8x1xf32>
    %20 = vector.extract_strided_slice %0 {offsets = [2, 0], sizes = [1, 128], strides = [1, 1]} : vector<4x128xf32> to vector<1x128xf32>
    %21 = vector.broadcast %19 : vector<8x1xf32> to vector<8x128xf32>
    %22 = vector.broadcast %20 : vector<1x128xf32> to vector<8x128xf32>
    %23 = arith.mulf %21, %22 : vector<8x128xf32>
    %24 = arith.addf %18, %23 : vector<8x128xf32>
    %25 = vector.extract_strided_slice %2 {offsets = [0, 3], sizes = [8, 1], strides = [1, 1]} : vector<8x4xf32> to vector<8x1xf32>
    %26 = vector.extract_strided_slice %0 {offsets = [3, 0], sizes = [1, 128], strides = [1, 1]} : vector<4x128xf32> to vector<1x128xf32>
    %27 = vector.broadcast %25 : vector<8x1xf32> to vector<8x128xf32>
    %28 = vector.broadcast %26 : vector<1x128xf32> to vector<8x128xf32>
    %29 = arith.mulf %27, %28 : vector<8x128xf32>
    %30 = arith.addf %24, %29 : vector<8x128xf32>
    %31 = vector.broadcast %3 : vector<8x1xf32> to vector<8x128xf32>
    %32 = arith.addf %30, %31 : vector<8x128xf32>
    %cst = arith.constant 0.000000e+00 : f32
    %33 = vector.broadcast %cst : f32 to vector<8x128xf32>
    %34 = arith.maximumf %32, %33 : vector<8x128xf32>
    %35 = vector.extract_strided_slice %4 {offsets = [0, 0], sizes = [8, 1], strides = [1, 1]} : vector<8x8xf32> to vector<8x1xf32>
    %36 = vector.extract_strided_slice %34 {offsets = [0, 0], sizes = [1, 128], strides = [1, 1]} : vector<8x128xf32> to vector<1x128xf32>
    %37 = vector.broadcast %35 : vector<8x1xf32> to vector<8x128xf32>
    %38 = vector.broadcast %36 : vector<1x128xf32> to vector<8x128xf32>
    %39 = arith.mulf %37, %38 : vector<8x128xf32>
    %40 = vector.extract_strided_slice %4 {offsets = [0, 1], sizes = [8, 1], strides = [1, 1]} : vector<8x8xf32> to vector<8x1xf32>
    %41 = vector.extract_strided_slice %34 {offsets = [1, 0], sizes = [1, 128], strides = [1, 1]} : vector<8x128xf32> to vector<1x128xf32>
    %42 = vector.broadcast %40 : vector<8x1xf32> to vector<8x128xf32>
    %43 = vector.broadcast %41 : vector<1x128xf32> to vector<8x128xf32>
    %44 = arith.mulf %42, %43 : vector<8x128xf32>
    %45 = arith.addf %39, %44 : vector<8x128xf32>
    %46 = vector.extract_strided_slice %4 {offsets = [0, 2], sizes = [8, 1], strides = [1, 1]} : vector<8x8xf32> to vector<8x1xf32>
    %47 = vector.extract_strided_slice %34 {offsets = [2, 0], sizes = [1, 128], strides = [1, 1]} : vector<8x128xf32> to vector<1x128xf32>
    %48 = vector.broadcast %46 : vector<8x1xf32> to vector<8x128xf32>
    %49 = vector.broadcast %47 : vector<1x128xf32> to vector<8x128xf32>
    %50 = arith.mulf %48, %49 : vector<8x128xf32>
    %51 = arith.addf %45, %50 : vector<8x128xf32>
    %52 = vector.extract_strided_slice %4 {offsets = [0, 3], sizes = [8, 1], strides = [1, 1]} : vector<8x8xf32> to vector<8x1xf32>
    %53 = vector.extract_strided_slice %34 {offsets = [3, 0], sizes = [1, 128], strides = [1, 1]} : vector<8x128xf32> to vector<1x128xf32>
    %54 = vector.broadcast %52 : vector<8x1xf32> to vector<8x128xf32>
    %55 = vector.broadcast %53 : vector<1x128xf32> to vector<8x128xf32>
    %56 = arith.mulf %54, %55 : vector<8x128xf32>
    %57 = arith.addf %51, %56 : vector<8x128xf32>
    %58 = vector.extract_strided_slice %4 {offsets = [0, 4], sizes = [8, 1], strides = [1, 1]} : vector<8x8xf32> to vector<8x1xf32>
    %59 = vector.extract_strided_slice %34 {offsets = [4, 0], sizes = [1, 128], strides = [1, 1]} : vector<8x128xf32> to vector<1x128xf32>
    %60 = vector.broadcast %58 : vector<8x1xf32> to vector<8x128xf32>
    %61 = vector.broadcast %59 : vector<1x128xf32> to vector<8x128xf32>
    %62 = arith.mulf %60, %61 : vector<8x128xf32>
    %63 = arith.addf %57, %62 : vector<8x128xf32>
    %64 = vector.extract_strided_slice %4 {offsets = [0, 5], sizes = [8, 1], strides = [1, 1]} : vector<8x8xf32> to vector<8x1xf32>
    %65 = vector.extract_strided_slice %34 {offsets = [5, 0], sizes = [1, 128], strides = [1, 1]} : vector<8x128xf32> to vector<1x128xf32>
    %66 = vector.broadcast %64 : vector<8x1xf32> to vector<8x128xf32>
    %67 = vector.broadcast %65 : vector<1x128xf32> to vector<8x128xf32>
    %68 = arith.mulf %66, %67 : vector<8x128xf32>
    %69 = arith.addf %63, %68 : vector<8x128xf32>
    %70 = vector.extract_strided_slice %4 {offsets = [0, 6], sizes = [8, 1], strides = [1, 1]} : vector<8x8xf32> to vector<8x1xf32>
    %71 = vector.extract_strided_slice %34 {offsets = [6, 0], sizes = [1, 128], strides = [1, 1]} : vector<8x128xf32> to vector<1x128xf32>
    %72 = vector.broadcast %70 : vector<8x1xf32> to vector<8x128xf32>
    %73 = vector.broadcast %71 : vector<1x128xf32> to vector<8x128xf32>
    %74 = arith.mulf %72, %73 : vector<8x128xf32>
    %75 = arith.addf %69, %74 : vector<8x128xf32>
    %76 = vector.extract_strided_slice %4 {offsets = [0, 7], sizes = [8, 1], strides = [1, 1]} : vector<8x8xf32> to vector<8x1xf32>
    %77 = vector.extract_strided_slice %34 {offsets = [7, 0], sizes = [1, 128], strides = [1, 1]} : vector<8x128xf32> to vector<1x128xf32>
    %78 = vector.broadcast %76 : vector<8x1xf32> to vector<8x128xf32>
    %79 = vector.broadcast %77 : vector<1x128xf32> to vector<8x128xf32>
    %80 = arith.mulf %78, %79 : vector<8x128xf32>
    %81 = arith.addf %75, %80 : vector<8x128xf32>
    %82 = vector.broadcast %5 : vector<8x1xf32> to vector<8x128xf32>
    %83 = arith.addf %81, %82 : vector<8x128xf32>
    %cst_3 = arith.constant 0.000000e+00 : f32
    %84 = vector.broadcast %cst_3 : f32 to vector<8x128xf32>
    %85 = arith.maximumf %83, %84 : vector<8x128xf32>
    %86 = vector.extract_strided_slice %6 {offsets = [0, 0], sizes = [3, 1], strides = [1, 1]} : vector<3x8xf32> to vector<3x1xf32>
    %87 = vector.extract_strided_slice %85 {offsets = [0, 0], sizes = [1, 128], strides = [1, 1]} : vector<8x128xf32> to vector<1x128xf32>
    %88 = vector.broadcast %86 : vector<3x1xf32> to vector<3x128xf32>
    %89 = vector.broadcast %87 : vector<1x128xf32> to vector<3x128xf32>
    %90 = arith.mulf %88, %89 : vector<3x128xf32>
    %91 = vector.extract_strided_slice %6 {offsets = [0, 1], sizes = [3, 1], strides = [1, 1]} : vector<3x8xf32> to vector<3x1xf32>
    %92 = vector.extract_strided_slice %85 {offsets = [1, 0], sizes = [1, 128], strides = [1, 1]} : vector<8x128xf32> to vector<1x128xf32>
    %93 = vector.broadcast %91 : vector<3x1xf32> to vector<3x128xf32>
    %94 = vector.broadcast %92 : vector<1x128xf32> to vector<3x128xf32>
    %95 = arith.mulf %93, %94 : vector<3x128xf32>
    %96 = arith.addf %90, %95 : vector<3x128xf32>
    %97 = vector.extract_strided_slice %6 {offsets = [0, 2], sizes = [3, 1], strides = [1, 1]} : vector<3x8xf32> to vector<3x1xf32>
    %98 = vector.extract_strided_slice %85 {offsets = [2, 0], sizes = [1, 128], strides = [1, 1]} : vector<8x128xf32> to vector<1x128xf32>
    %99 = vector.broadcast %97 : vector<3x1xf32> to vector<3x128xf32>
    %100 = vector.broadcast %98 : vector<1x128xf32> to vector<3x128xf32>
    %101 = arith.mulf %99, %100 : vector<3x128xf32>
    %102 = arith.addf %96, %101 : vector<3x128xf32>
    %103 = vector.extract_strided_slice %6 {offsets = [0, 3], sizes = [3, 1], strides = [1, 1]} : vector<3x8xf32> to vector<3x1xf32>
    %104 = vector.extract_strided_slice %85 {offsets = [3, 0], sizes = [1, 128], strides = [1, 1]} : vector<8x128xf32> to vector<1x128xf32>
    %105 = vector.broadcast %103 : vector<3x1xf32> to vector<3x128xf32>
    %106 = vector.broadcast %104 : vector<1x128xf32> to vector<3x128xf32>
    %107 = arith.mulf %105, %106 : vector<3x128xf32>
    %108 = arith.addf %102, %107 : vector<3x128xf32>
    %109 = vector.extract_strided_slice %6 {offsets = [0, 4], sizes = [3, 1], strides = [1, 1]} : vector<3x8xf32> to vector<3x1xf32>
    %110 = vector.extract_strided_slice %85 {offsets = [4, 0], sizes = [1, 128], strides = [1, 1]} : vector<8x128xf32> to vector<1x128xf32>
    %111 = vector.broadcast %109 : vector<3x1xf32> to vector<3x128xf32>
    %112 = vector.broadcast %110 : vector<1x128xf32> to vector<3x128xf32>
    %113 = arith.mulf %111, %112 : vector<3x128xf32>
    %114 = arith.addf %108, %113 : vector<3x128xf32>
    %115 = vector.extract_strided_slice %6 {offsets = [0, 5], sizes = [3, 1], strides = [1, 1]} : vector<3x8xf32> to vector<3x1xf32>
    %116 = vector.extract_strided_slice %85 {offsets = [5, 0], sizes = [1, 128], strides = [1, 1]} : vector<8x128xf32> to vector<1x128xf32>
    %117 = vector.broadcast %115 : vector<3x1xf32> to vector<3x128xf32>
    %118 = vector.broadcast %116 : vector<1x128xf32> to vector<3x128xf32>
    %119 = arith.mulf %117, %118 : vector<3x128xf32>
    %120 = arith.addf %114, %119 : vector<3x128xf32>
    %121 = vector.extract_strided_slice %6 {offsets = [0, 6], sizes = [3, 1], strides = [1, 1]} : vector<3x8xf32> to vector<3x1xf32>
    %122 = vector.extract_strided_slice %85 {offsets = [6, 0], sizes = [1, 128], strides = [1, 1]} : vector<8x128xf32> to vector<1x128xf32>
    %123 = vector.broadcast %121 : vector<3x1xf32> to vector<3x128xf32>
    %124 = vector.broadcast %122 : vector<1x128xf32> to vector<3x128xf32>
    %125 = arith.mulf %123, %124 : vector<3x128xf32>
    %126 = arith.addf %120, %125 : vector<3x128xf32>
    %127 = vector.extract_strided_slice %6 {offsets = [0, 7], sizes = [3, 1], strides = [1, 1]} : vector<3x8xf32> to vector<3x1xf32>
    %128 = vector.extract_strided_slice %85 {offsets = [7, 0], sizes = [1, 128], strides = [1, 1]} : vector<8x128xf32> to vector<1x128xf32>
    %129 = vector.broadcast %127 : vector<3x1xf32> to vector<3x128xf32>
    %130 = vector.broadcast %128 : vector<1x128xf32> to vector<3x128xf32>
    %131 = arith.mulf %129, %130 : vector<3x128xf32>
    %132 = arith.addf %126, %131 : vector<3x128xf32>
    %133 = vector.broadcast %7 : vector<3x1xf32> to vector<3x128xf32>
    %134 = arith.addf %132, %133 : vector<3x128xf32>
    %cst_4 = arith.constant 0.000000e+00 : f32
    %135 = vector.broadcast %cst_4 : f32 to vector<3x128xf32>
    %136 = arith.maximumf %134, %135 : vector<3x128xf32>
    %137 = vector.extract_strided_slice %136 {offsets = [0, 0], sizes = [1, 128], strides = [1, 1]} : vector<3x128xf32> to vector<1x128xf32>
    %138 = vector.extract_strided_slice %136 {offsets = [1, 0], sizes = [1, 128], strides = [1, 1]} : vector<3x128xf32> to vector<1x128xf32>
    %139 = arith.maximumf %137, %138 : vector<1x128xf32>
    %140 = vector.extract_strided_slice %136 {offsets = [2, 0], sizes = [1, 128], strides = [1, 1]} : vector<3x128xf32> to vector<1x128xf32>
    %141 = arith.maximumf %139, %140 : vector<1x128xf32>
    %142 = vector.broadcast %141 : vector<1x128xf32> to vector<3x128xf32>
    %143 = arith.subf %136, %142 : vector<3x128xf32>
    %144 = math.exp %143 : vector<3x128xf32>
    %145 = vector.extract_strided_slice %144 {offsets = [0, 0], sizes = [1, 128], strides = [1, 1]} : vector<3x128xf32> to vector<1x128xf32>
    %146 = vector.extract_strided_slice %144 {offsets = [1, 0], sizes = [1, 128], strides = [1, 1]} : vector<3x128xf32> to vector<1x128xf32>
    %147 = arith.addf %145, %146 : vector<1x128xf32>
    %148 = vector.extract_strided_slice %144 {offsets = [2, 0], sizes = [1, 128], strides = [1, 1]} : vector<3x128xf32> to vector<1x128xf32>
    %149 = arith.addf %147, %148 : vector<1x128xf32>
    %150 = tpu.reciprocal %149 : vector<1x128xf32> -> vector<1x128xf32>
    %151 = vector.broadcast %150 : vector<1x128xf32> to vector<3x128xf32>
    %152 = arith.mulf %144, %151 : vector<3x128xf32>
    %c0_5 = arith.constant 0 : index
    %c0_6 = arith.constant 0 : index
    %153 = vector.load %arg3[%c0_5, %c0_6] : memref<3x128xf32, #tpu.memory_space<vmem>>, vector<3x128xf32>
    tpu.vector_store %arg3[%c0_5, %c0_6], %152 {strides = array<i32>} : memref<3x128xf32, #tpu.memory_space<vmem>>, vector<3x128xf32>,
    return
  }
  func.func @transform_0(%arg0: i32) -> (i32, i32) {
    %c0_i32 = arith.constant 0 : i32
    %c0_i32_0 = arith.constant 0 : i32
    return %c0_i32, %arg0 : i32, i32
  }
  func.func @transform_1(%arg0: i32) -> (i32, i32) {
    %c0_i32 = arith.constant 0 : i32
    %c0_i32_0 = arith.constant 0 : i32
    %c0_i32_1 = arith.constant 0 : i32
    return %c0_i32, %c0_i32_0 : i32, i32
  }
  func.func @transform_2(%arg0: i32) -> (i32, i32) {
    %c0_i32 = arith.constant 0 : i32
    %c0_i32_0 = arith.constant 0 : i32
    return %c0_i32, %arg0 : i32, i32
  }
}

</mosaic_0001>

<llo_original>
// kernel: tpu_custom_call.1
$region0: #{tpu_custom_call.1}
  #allocation0 [shape = 'u32[]', space=smem, size = 0x4, offset = 0x4, fixed_abs, tag = 'smem constant byte address 0x4 - core index']
  #allocation1 [shape = 'u32[72,128]{1,0:T(1,128)}', space=vmem, size = 0x9000, scoped, tag = 'internal scratch']
  %s0 = inlined_call_operand.hbm [shape: f32[4,8], index: 0, kind: input, shape index: {}]
  %s1 = inlined_call_operand.hbm [shape: f32[8,128], index: 1, kind: input, shape index: {}]
  %s2 = inlined_call_operand.hbm [shape: f32[3,8], index: 2, kind: output, shape index: {}]
  %s3 = sld [smem:[#allocation0]]
  $region26: #{tpu_custom_call.1} parent=0
    _
  %s5 = ssub.s32 1, %s3
  %s6 = scalar_select 0, %s5, %s3
  $region1: #{tpu_custom_call.1} parent=0
    #allocation2 [shape = 'u8[2048]{0}', space=vmem, size = 0x800, scoped, tag = 'input window, operand 0, single buffered']
    #allocation3 [shape = 's32[1]{0}', space=sflag, size = 0x4, scoped, tag = 'scoped memory for tpu_custom_call.1']
    #allocation4 [shape = 's32[1]{0}', space=sflag, size = 0x4, scoped, tag = 'scoped memory for tpu_custom_call.1']
    #allocation5 [shape = 'u8[4096]{0}', space=vmem, size = 0x1000, scoped, tag = 'input window, operand 1, single buffered']
    #allocation6 [shape = 's32[1]{0}', space=sflag, size = 0x4, scoped, tag = 'scoped memory for tpu_custom_call.1']
    #allocation7 [shape = 'u8[2048]{0}', space=vmem, size = 0x800, scoped, tag = 'output window, operand 0, single buffered']
    %7 = vsyncpa [#allocation3], 0
    %8 = vsyncpa [#allocation6], 0
    %9 = vsyncpa [#allocation4], 0
    // Predicated region
    $region2: #{tpu_custom_call.1} parent=1 // pred_check
      _
    $region3: #{tpu_custom_call.1} parent=1 // pred_check_branch
      %11 = sbr.rel (0) target = $region5
    $region4: #{tpu_custom_call.1} parent=1 // pred_region
      %13 = vsyncadd [#allocation3], 0
      %s15 = sshll.u32 %s0, 4
      %s16 = int_to_ptr.hbm [resolvable:$true] %s15
      %s17 = sshll.u32 [#allocation2], 4
      %s18 = int_to_ptr.vmem [resolvable:$true] %s17
      %20 = dma.hbm_to_vmem [thread:$0]  %s16, 64, %s18, [#allocation3]
    $region5: #{tpu_custom_call.1} parent=1 // pred_fallthru
      _
    // Predicated region
    $region6: #{tpu_custom_call.1} parent=1 // pred_check
      _
    $region7: #{tpu_custom_call.1} parent=1 // pred_check_branch
      %22 = sbr.rel (0) target = $region9
    $region8: #{tpu_custom_call.1} parent=1 // pred_region
      %24 = vsyncadd [#allocation6], 0
      %s26 = sshll.u32 %s1, 4
      %s27 = int_to_ptr.hbm [resolvable:$true] %s26
      %s28 = sshll.u32 [#allocation5], 4
      %s29 = int_to_ptr.vmem [resolvable:$true] %s28
      %31 = dma.hbm_to_vmem [thread:$0]  %s27, 128, %s29, [#allocation6]
    $region9: #{tpu_custom_call.1} parent=1 // pred_fallthru
      _
    // Predicated region
    $region10: #{tpu_custom_call.1} parent=1 // pred_check
      _
    $region11: #{tpu_custom_call.1} parent=1 // pred_check_branch
      %33 = sbr.rel (0) target = $region13
    $region12: #{tpu_custom_call.1} parent=1 // pred_region
      %35 = dma.done [#allocation3], 64
    $region13: #{tpu_custom_call.1} parent=1 // pred_fallthru
      _
    // Predicated region
    $region14: #{tpu_custom_call.1} parent=1 // pred_check
      _
    $region15: #{tpu_custom_call.1} parent=1 // pred_check_branch
      %37 = sbr.rel (0) target = $region17
    $region16: #{tpu_custom_call.1} parent=1 // pred_region
      %39 = dma.done [#allocation6], 128
    $region17: #{tpu_custom_call.1} parent=1 // pred_fallthru
      _
    %v40 = vld [vmem:[#allocation2] sm:$0xf]
    %v41 = vld [vmem:[#allocation5] sm:$0xff]
    %43 = vset.pattern.permute.xlu0 0
    %44 = vperm.xlu0 %43, %v41
    %v45 = vpop.permute.xlu0 %44
    %v47 = vperm.slane %v40, 0
    %v48 = vmul.f32 %v45, %v47
    %49 = vset.pattern.permute.xlu0 1
    %50 = vperm.xlu0 %49, %v41
    %v51 = vpop.permute.xlu0 %50
    %v53 = vperm.slane %v40, 1
    %v54 = vmul.f32 %v51, %v53
    %v55 = vadd.f32 %v48, %v54
    %56 = vset.pattern.permute.xlu0 2
    %57 = vperm.xlu0 %56, %v41
    %v58 = vpop.permute.xlu0 %57
    %v60 = vperm.slane %v40, 2
    %v61 = vmul.f32 %v58, %v60
    %v62 = vadd.f32 %v55, %v61
    %63 = vset.pattern.permute.xlu0 3
    %64 = vperm.xlu0 %63, %v41
    %v65 = vpop.permute.xlu0 %64
    %v67 = vperm.slane %v40, 3
    %v68 = vmul.f32 %v65, %v67
    %v69 = vadd.f32 %v62, %v68
    %70 = vset.pattern.permute.xlu0 4
    %71 = vperm.xlu0 %70, %v41
    %v72 = vpop.permute.xlu0 %71
    %v74 = vadd.f32 %v69, %v72
    %v75 = vmax.f32 %v74, 0.0
    %76 = vset.pattern.permute.xlu0 5
    %77 = vperm.xlu0 %76, %v41
    %v78 = vpop.permute.xlu0 %77
    %v80 = vperm.slane %v75, 0
    %v81 = vmul.f32 %v78, %v80
    %82 = vset.pattern.permute.xlu0 6
    %83 = vperm.xlu0 %82, %v41
    %v84 = vpop.permute.xlu0 %83
    %v86 = vperm.slane %v75, 1
    %v87 = vmul.f32 %v84, %v86
    %v88 = vadd.f32 %v81, %v87
    %89 = vset.pattern.permute.xlu0 7
    %90 = vperm.xlu0 %89, %v41
    %v91 = vpop.permute.xlu0 %90
    %v93 = vperm.slane %v75, 2
    %v94 = vmul.f32 %v91, %v93
    %v95 = vadd.f32 %v88, %v94
    %96 = vset.pattern.permute.xlu0 8
    %97 = vperm.xlu0 %96, %v41
    %v98 = vpop.permute.xlu0 %97
    %v100 = vperm.slane %v75, 3
    %v101 = vmul.f32 %v98, %v100
    %v102 = vadd.f32 %v95, %v101
    %103 = vset.pattern.permute.xlu0 9
    %104 = vperm.xlu0 %103, %v41
    %v105 = vpop.permute.xlu0 %104
    %v107 = vperm.slane %v75, 4
    %v108 = vmul.f32 %v105, %v107
    %v109 = vadd.f32 %v102, %v108
    %110 = vset.pattern.permute.xlu0 10
    %111 = vperm.xlu0 %110, %v41
    %v112 = vpop.permute.xlu0 %111
    %v114 = vperm.slane %v75, 5
    %v115 = vmul.f32 %v112, %v114
    %v116 = vadd.f32 %v109, %v115
    %117 = vset.pattern.permute.xlu0 11
    %118 = vperm.xlu0 %117, %v41
    %v119 = vpop.permute.xlu0 %118
    %v121 = vperm.slane %v75, 6
    %v122 = vmul.f32 %v119, %v121
    %v123 = vadd.f32 %v116, %v122
    %124 = vset.pattern.permute.xlu0 12
    %125 = vperm.xlu0 %124, %v41
    %v126 = vpop.permute.xlu0 %125
    %v128 = vperm.slane %v75, 7
    %v129 = vmul.f32 %v126, %v128
    %v130 = vadd.f32 %v123, %v129
    %131 = vset.pattern.permute.xlu0 13
    %132 = vperm.xlu0 %131, %v41
    %v133 = vpop.permute.xlu0 %132
    %v135 = vadd.f32 %v130, %v133
    %v136 = vmax.f32 %v135, 0.0
    %137 = vset.pattern.permute.xlu0 14
    %138 = vperm.xlu0 %137, %v41
    %v139 = vpop.permute.xlu0 %138
    %v141 = vperm.slane %v136, 0
    %v142 = vmul.f32 %v139, %v141
    %143 = vset.pattern.permute.xlu0 15
    %144 = vperm.xlu0 %143, %v41
    %v145 = vpop.permute.xlu0 %144
    %v147 = vperm.slane %v136, 1
    %v148 = vmul.f32 %v145, %v147
    %v149 = vadd.f32 %v142, %v148
    %150 = vset.pattern.permute.xlu0 16
    %151 = vperm.xlu0 %150, %v41
    %v152 = vpop.permute.xlu0 %151
    %v154 = vperm.slane %v136, 2
    %v155 = vmul.f32 %v152, %v154
    %v156 = vadd.f32 %v149, %v155
    %157 = vset.pattern.permute.xlu0 17
    %158 = vperm.xlu0 %157, %v41
    %v159 = vpop.permute.xlu0 %158
    %v161 = vperm.slane %v136, 3
    %v162 = vmul.f32 %v159, %v161
    %v163 = vadd.f32 %v156, %v162
    %164 = vset.pattern.permute.xlu0 18
    %165 = vperm.xlu0 %164, %v41
    %v166 = vpop.permute.xlu0 %165
    %v168 = vperm.slane %v136, 4
    %v169 = vmul.f32 %v166, %v168
    %v170 = vadd.f32 %v163, %v169
    %171 = vset.pattern.permute.xlu0 19
    %172 = vperm.xlu0 %171, %v41
    %v173 = vpop.permute.xlu0 %172
    %v175 = vperm.slane %v136, 5
    %v176 = vmul.f32 %v173, %v175
    %v177 = vadd.f32 %v170, %v176
    %178 = vset.pattern.permute.xlu0 20
    %179 = vperm.xlu0 %178, %v41
    %v180 = vpop.permute.xlu0 %179
    %v182 = vperm.slane %v136, 6
    %v183 = vmul.f32 %v180, %v182
    %v184 = vadd.f32 %v177, %v183
    %185 = vset.pattern.permute.xlu0 21
    %186 = vperm.xlu0 %185, %v41
    %v187 = vpop.permute.xlu0 %186
    %v189 = vperm.slane %v136, 7
    %v190 = vmul.f32 %v187, %v189
    %v191 = vadd.f32 %v184, %v190
    %192 = vset.pattern.permute.xlu0 22
    %193 = vperm.xlu0 %192, %v41
    %v194 = vpop.permute.xlu0 %193
    %v196 = vadd.f32 %v191, %v194
    %v197 = vmax.f32 %v196, 0.0
    %v199 = vrot.slane %v197, 1
    %v201 = vmax.f32 %v197, %v199
    %v202 = vrot.slane %v197, 2
    %v204 = vmax.f32 %v201, %v202
    %v205 = vperm.slane %v204, 0
    %v206 = vsub.f32 %v197, %v205
    %v207 = vmul.f32 %v206, 1.442695
    %v208 = vpow.pop %v207
    %v210 = vrot.slane %v208, 1
    %v212 = vadd.f32 %v208, %v210
    %v213 = vrot.slane %v208, 2
    %v215 = vadd.f32 %v212, %v213
    %v216 = vrcp.pop %v215
    %v217 = vmul.f32 %v215, %v216
    %v218 = vsub.f32 1.0, %v217
    %v219 = vmul.f32 %v216, %v218
    %v220 = vadd.f32 %v216, %v219
    %vm221 = vweird.f32 %v215
    %vm222 = vweird.f32 %v216
    %vm223 = vmor %vm221, %vm222
    %v224 = vsel %vm223, %v216, %v220
    %v225 = vand.u32 2147483647, %v215
    %vm226 = vcmp.eq.f32.partialorder %v225, 8.507059e+37
    %v227 = vand.u32 %v215, 2147483648
    %v228 = vor.u32 1.1754944e-38, %v227
    %v229 = vsel %vm226, %v228, %v224
    %v230 = vperm.slane %v229, 0
    %v231 = vmul.f32 %v208, %v230
    %232 = vst [vmem:[#allocation7] sm:$0x7] %v231
    // Predicated region
    $region18: #{tpu_custom_call.1} parent=1 // pred_check
      _
    $region19: #{tpu_custom_call.1} parent=1 // pred_check_branch
      %234 = sbr.rel (0) target = $region21
    $region20: #{tpu_custom_call.1} parent=1 // pred_region
      %236 = vsyncadd [#allocation4], 0
      %s238 = sshll.u32 [#allocation7], 4
      %s239 = int_to_ptr.vmem [resolvable:$true] %s238
      %s240 = sshll.u32 %s2, 4
      %s241 = int_to_ptr.hbm [resolvable:$true] %s240
      %243 = dma.vmem_to_hbm [thread:$0]  %s239, 64, %s241, [#allocation4]
    $region21: #{tpu_custom_call.1} parent=1 // pred_fallthru
      _
    // Predicated region
    $region22: #{tpu_custom_call.1} parent=1 // pred_check
      _
    $region23: #{tpu_custom_call.1} parent=1 // pred_check_branch
      %245 = sbr.rel (0) target = $region25
    $region24: #{tpu_custom_call.1} parent=1 // pred_region
      %247 = dma.done [#allocation4], 64
    $region25: #{tpu_custom_call.1} parent=1 // pred_fallthru
      _
    %248 = vsyncpa [#allocation3], 1
    %249 = vsyncpa [#allocation6], 1
    %250 = vsyncpa [#allocation4], 1

</llo_original>
